<compile_context>
chip_gen: v7x
topology: tpu7x:2x2x1
jax: 0.10.0
libtpu: 0.0.40
codegen_flags: <defaults>
</compile_context>

<pallas_src>
import functools

import jax
import jax.numpy as jnp
from jax.experimental import pallas as pl
from jax.experimental.pallas import tpu as pltpu


def _round_up(x, m):
    return ((x + m - 1) // m) * m


def _cdiv(a, b):
    return (a + b - 1) // b


_OUT_TILE_BYTES = 4 << 20   # target output block per buffer (~4 MiB)
_SPLIT_FLOOR_BYTES = 1 << 20  # never shrink below ~1 MiB when splitting for megacore
_TARGET_STEPS = 4           # keep >=4 grid steps on large problems (v7x: 2 TCs)


def _pick_rows(total_rows, out_bytes_per_row):
    """Rows per grid step: ~4 MiB output tile, multiple of 8, and >= _TARGET_STEPS
    grid steps when that still leaves >= ~1 MiB output tiles."""
    budget = max(8, (_OUT_TILE_BYTES // out_bytes_per_row) // 8 * 8)
    rows = min(budget, _round_up(total_rows, 8))
    split_floor = max(8, (_SPLIT_FLOOR_BYTES // out_bytes_per_row) // 8 * 8)
    if total_rows >= _TARGET_STEPS * split_floor:
        rows = min(rows, max(split_floor,
                             _round_up(_cdiv(total_rows, _TARGET_STEPS), 8)))
    return max(8, rows)


def _vmem_limit(rows, out_bytes_per_row, in_bytes_per_row):
    # Double-buffered input + output blocks (input rows are lane-padded to 128
    # lanes in VMEM, so count them at full width) + margin for small residents
    # and internal scratch.
    footprint = 2 * rows * (out_bytes_per_row + in_bytes_per_row)
    return int(min(48 << 20, max(32 << 20, footprint + (4 << 20))))


# ---------------------------------------------------------------------------
# Kernels
# ---------------------------------------------------------------------------

def _rotary_kernel_generic(t_ref, inv_ref, o_ref):
    # t_ref:   (TM, 1)    coordinate column tile
    # inv_ref: (1, dim)   pre-concatenated [inv_freq, inv_freq] * (scale/min_freq)
    # o_ref:   (TM, dim)  output tile — single full-width store
    o_ref[...] = (t_ref[...] * inv_ref[...]).astype(o_ref.dtype)


def _rotary_kernel_packed(pack, c_ref, tbl_ref, o_ref):
    # c_ref:   (TR, pack)  pack consecutive coordinates per packed output row
    # tbl_ref: (pack, 128) tbl[p, l] = (l // dim == p) * inv_full[l % dim] * scale
    # o_ref:   (TR, 128)   lane-dense packed output tile
    #
    # out[r, l] = c[r, l // dim] * inv_full[l % dim] * scale
    #           = sum_p c[r, p] * tbl[p, l]          (exactly one nonzero term)
    # Static FMA chain (pack <= 16): no iota / integer divide / compare chain.
    c = c_ref[...]
    tbl = tbl_ref[...]
    acc = c[:, 0:1] * tbl[0:1, :]
    for p in range(1, pack):
        acc = acc + c[:, p:p + 1] * tbl[p:p + 1, :]
    o_ref[...] = acc.astype(o_ref.dtype)


# ---------------------------------------------------------------------------
# Wrapper
# ---------------------------------------------------------------------------

def rotary_embedding(coordinates, dim, min_freq=1.0 / 64, scale=1.0,
                     out_dtype=jnp.float32):
    """coordinates: float array of shape (..., N). Returns (..., N, dim)."""
    if dim % 2 != 0:
        raise ValueError("RotaryEmbedding requires an even `dim`.")

    coords = jnp.asarray(coordinates, dtype=jnp.float32)
    lead_shape = coords.shape
    M = int(coords.size)
    scale_factor = float(scale / min_freq)

    # scale/min_freq folded into inv on the host (<=1 ulp reordering).
    inv_freq = 1.0 / (10000.0 ** (jnp.arange(0, dim, 2, dtype=jnp.float32) / dim))
    inv_full = jnp.concatenate([inv_freq, inv_freq]) * scale_factor      # (dim,)

    coords_flat = coords.reshape(-1)

    # Lane-dense packed path when dim divides 128 (typical rotary dims 8..64).
    use_packed = (dim < 128) and (128 % dim == 0) and (dim >= 8)

    if use_packed:
        pack = 128 // dim                 # coordinate rows per 128-lane output row
        R = _cdiv(M, pack)                # packed rows (exact, no tile padding)
        M_pad = R * pack
        if M_pad != M:
            # Tiny (< pack elements) pad of the small input only.
            coords_flat = jnp.pad(coords_flat, (0, M_pad - M))
        c2 = coords_flat.reshape(R, pack)

        # Host-precomputed selection * inv table: tbl[p, l] = inv_full[l % dim]
        # if l // dim == p else 0.
        lanes = jnp.arange(128)
        tbl = jnp.where((lanes // dim)[None, :] == jnp.arange(pack)[:, None],
                        inv_full[lanes % dim][None, :],
                        0.0).astype(jnp.float32)                         # (pack, 128)

        tr = _pick_rows(R, 128 * 4)
        kernel = functools.partial(_rotary_kernel_packed, pack)
        out = pl.pallas_call(
            kernel,
            out_shape=jax.ShapeDtypeStruct((R, 128), out_dtype),
            grid_spec=pltpu.PrefetchScalarGridSpec(
                num_scalar_prefetch=0,
                grid=(_cdiv(R, tr),),
                in_specs=[
                    pl.BlockSpec((tr, pack), lambda i: (i, 0)),      # packed coords
                    pl.BlockSpec((pack, 128), lambda i: (0, 0)),     # inv table
                ],
                out_specs=pl.BlockSpec((tr, 128), lambda i: (i, 0)),
            ),
            compiler_params=pltpu.CompilerParams(
                dimension_semantics=("parallel",),
                # coord block lane-pads to 128 lanes in VMEM: count it full-width.
                vmem_limit_bytes=_vmem_limit(tr, 128 * 4, 128 * 4)),
        )(c2, tbl)
        out = out.reshape(M_pad, dim)      # same row-major bytes, free re-view
        if M_pad != M:
            # TODO(synk): mask the (<pack)-row tail in-kernel to avoid this copy.
            out = out[:M]
    else:
        # Generic path: dim >= 128 (lane-dense when dim % 128 == 0) or awkward dims.
        dim_padded = _round_up(dim, 128)   # VMEM lane padding of the output block
        inv_row = inv_full.reshape(1, dim)
        t_col = coords_flat.reshape(M, 1)

        tm = _pick_rows(M, dim_padded * 4)
        out = pl.pallas_call(
            _rotary_kernel_generic,
            out_shape=jax.ShapeDtypeStruct((M, dim), out_dtype),
            grid_spec=pltpu.PrefetchScalarGridSpec(
                num_scalar_prefetch=0,
                grid=(_cdiv(M, tm),),
                in_specs=[
                    pl.BlockSpec((tm, 1), lambda i: (i, 0)),         # coord column
                    pl.BlockSpec((1, dim), lambda i: (0, 0)),        # [inv, inv]*scale
                ],
                out_specs=pl.BlockSpec((tm, dim), lambda i: (i, 0)),
            ),
            compiler_params=pltpu.CompilerParams(
                dimension_semantics=("parallel",),
                # (tm, 1) coord block lane-pads to 128 lanes in VMEM.
                vmem_limit_bytes=_vmem_limit(tm, dim_padded * 4, 128 * 4)),
        )(t_col, inv_row)

    return out.reshape(lead_shape + (dim,))


def rotary_embedding_ref(coordinates, dim, min_freq=1.0 / 64, scale=1.0):
    """Plain-JAX reference mirroring the PyTorch module."""
    t = jnp.asarray(coordinates, dtype=jnp.float32) * (scale / min_freq)
    inv_freq = 1.0 / (10000.0 ** (jnp.arange(0, dim, 2, dtype=jnp.float32) / dim))
    freqs = jnp.einsum('...i,j->...ij', t, inv_freq)
    return jnp.concatenate((freqs, freqs), axis=-1)


if __name__ == "__main__":
    key = jax.random.PRNGKey(0)

    def _check(coords, dim, name):
        out = jax.block_until_ready(rotary_embedding(coords, dim))
        ref = rotary_embedding_ref(coords, dim)
        assert out.shape == ref.shape, (name, out.shape, ref.shape)
        assert jnp.allclose(out, ref, atol=1e-5, rtol=1e-5), f"mismatch: {name}"

    # 1) Primary packed lane-dense path: B=2, N=16, dim=32 (pack=4, no pad/slice).
    coords1 = jax.random.uniform(key, (2, 16), dtype=jnp.float32)
    _check(coords1, 32, "dim=32 aligned")

    # 2) Ragged packed-row count (R=5 not a multiple of 8): masked boundary block,
    #    no padding and no post-kernel slice (20 % pack == 0).
    coords2 = jax.random.uniform(jax.random.PRNGKey(1), (20,), dtype=jnp.float32)
    _check(coords2, 32, "dim=32 ragged rows")

    # 3) M % pack != 0: exercises the tiny coord pad + tail slice path.
    coords3 = jax.random.uniform(jax.random.PRNGKey(2), (2, 9), dtype=jnp.float32)
    _check(coords3, 32, "dim=32 ragged tail")

    # 4) Packed path with pack=2 (dim=64).
    coords4 = jax.random.uniform(jax.random.PRNGKey(3), (4, 16), dtype=jnp.float32)
    _check(coords4, 64, "dim=64")

    # 5) Generic lane-aligned path (dim = 128).
    coords5 = jax.random.uniform(jax.random.PRNGKey(4), (2, 8), dtype=jnp.float32)
    _check(coords5, 128, "dim=128 generic")

    print("KERNEL_OK")
</pallas_src>

<mosaic_0001>
module attributes {stable_mosaic.version = 11 : i64} {
  func.func @_rotary_kernel_packed(%arg0: i32, %arg1: memref<8x4xf32, #tpu.memory_space<vmem>>, %arg2: memref<4x128xf32, #tpu.memory_space<vmem>>, %arg3: memref<8x128xf32, #tpu.memory_space<vmem>>) attributes {dimension_semantics = [#tpu.dimension_semantics<parallel>], iteration_bounds = array<i64: 1>, scalar_prefetch = 0 : i64, scratch_operands = 0 : i64, tpu.core_type = #tpu.core_type<tc>, window_params = [{transform_indices = @transform_0, window_bounds = array<i64: 8, 4>}, {pipeline_mode = #tpu.pipeline_mode<synchronous>, transform_indices = @transform_1, window_bounds = array<i64: 4, 128>}, {transform_indices = @transform_2, window_bounds = array<i64: 8, 128>}]} {
    %c0 = arith.constant 0 : index
    %c0_0 = arith.constant 0 : index
    %0 = vector.load %arg1[%c0, %c0_0] : memref<8x4xf32, #tpu.memory_space<vmem>>, vector<8x4xf32>
    %c0_1 = arith.constant 0 : index
    %c0_2 = arith.constant 0 : index
    %1 = vector.load %arg2[%c0_1, %c0_2] : memref<4x128xf32, #tpu.memory_space<vmem>>, vector<4x128xf32>
    %2 = vector.extract_strided_slice %0 {offsets = [0, 0], sizes = [8, 1], strides = [1, 1]} : vector<8x4xf32> to vector<8x1xf32>
    %3 = vector.extract_strided_slice %1 {offsets = [0, 0], sizes = [1, 128], strides = [1, 1]} : vector<4x128xf32> to vector<1x128xf32>
    %4 = vector.broadcast %2 : vector<8x1xf32> to vector<8x128xf32>
    %5 = vector.broadcast %3 : vector<1x128xf32> to vector<8x128xf32>
    %6 = arith.mulf %4, %5 : vector<8x128xf32>
    %7 = vector.extract_strided_slice %0 {offsets = [0, 1], sizes = [8, 1], strides = [1, 1]} : vector<8x4xf32> to vector<8x1xf32>
    %8 = vector.extract_strided_slice %1 {offsets = [1, 0], sizes = [1, 128], strides = [1, 1]} : vector<4x128xf32> to vector<1x128xf32>
    %9 = vector.broadcast %7 : vector<8x1xf32> to vector<8x128xf32>
    %10 = vector.broadcast %8 : vector<1x128xf32> to vector<8x128xf32>
    %11 = arith.mulf %9, %10 : vector<8x128xf32>
    %12 = arith.addf %6, %11 : vector<8x128xf32>
    %13 = vector.extract_strided_slice %0 {offsets = [0, 2], sizes = [8, 1], strides = [1, 1]} : vector<8x4xf32> to vector<8x1xf32>
    %14 = vector.extract_strided_slice %1 {offsets = [2, 0], sizes = [1, 128], strides = [1, 1]} : vector<4x128xf32> to vector<1x128xf32>
    %15 = vector.broadcast %13 : vector<8x1xf32> to vector<8x128xf32>
    %16 = vector.broadcast %14 : vector<1x128xf32> to vector<8x128xf32>
    %17 = arith.mulf %15, %16 : vector<8x128xf32>
    %18 = arith.addf %12, %17 : vector<8x128xf32>
    %19 = vector.extract_strided_slice %0 {offsets = [0, 3], sizes = [8, 1], strides = [1, 1]} : vector<8x4xf32> to vector<8x1xf32>
    %20 = vector.extract_strided_slice %1 {offsets = [3, 0], sizes = [1, 128], strides = [1, 1]} : vector<4x128xf32> to vector<1x128xf32>
    %21 = vector.broadcast %19 : vector<8x1xf32> to vector<8x128xf32>
    %22 = vector.broadcast %20 : vector<1x128xf32> to vector<8x128xf32>
    %23 = arith.mulf %21, %22 : vector<8x128xf32>
    %24 = arith.addf %18, %23 : vector<8x128xf32>
    %c0_3 = arith.constant 0 : index
    %c0_4 = arith.constant 0 : index
    %25 = vector.load %arg3[%c0_3, %c0_4] : memref<8x128xf32, #tpu.memory_space<vmem>>, vector<8x128xf32>
    tpu.vector_store %arg3[%c0_3, %c0_4], %24 {strides = array<i32>} : memref<8x128xf32, #tpu.memory_space<vmem>>, vector<8x128xf32>,
    return
  }
  func.func @transform_0(%arg0: i32) -> (i32, i32) {
    %c0_i32 = arith.constant 0 : i32
    %c0_i32_0 = arith.constant 0 : i32
    return %arg0, %c0_i32 : i32, i32
  }
  func.func @transform_1(%arg0: i32) -> (i32, i32) {
    %c0_i32 = arith.constant 0 : i32
    %c0_i32_0 = arith.constant 0 : i32
    %c0_i32_1 = arith.constant 0 : i32
    return %c0_i32, %c0_i32_0 : i32, i32
  }
  func.func @transform_2(%arg0: i32) -> (i32, i32) {
    %c0_i32 = arith.constant 0 : i32
    %c0_i32_0 = arith.constant 0 : i32
    return %arg0, %c0_i32 : i32, i32
  }
}

</mosaic_0001>

<llo_original>
// kernel: tpu_custom_call.1
$region0: #{tpu_custom_call.1}
  #allocation0 [shape = 'u32[]', space=smem, size = 0x4, offset = 0x4, fixed_abs, tag = 'smem constant byte address 0x4 - core index']
  #allocation1 [shape = 'u32[144,128]{1,0:T(1,128)}', space=vmem, size = 0x12000, scoped, tag = 'internal scratch']
  %s0 = inlined_call_operand.vmem [shape: f32[8,4], index: 0, kind: input, shape index: {}]
  %s1 = inlined_call_operand.vmem [shape: f32[4,128], index: 1, kind: input, shape index: {}]
  %s2 = inlined_call_operand.hbm [shape: f32[8,128], index: 2, kind: output, shape index: {}]
  %s3 = sld [smem:[#allocation0]]
  $region18: #{tpu_custom_call.1} parent=0
    _
  %s5 = ssub.s32 1, %s3
  %s6 = scalar_select 0, %s5, %s3
  $region1: #{tpu_custom_call.1} parent=0
    #allocation2 [shape = 'u8[4096]{0}', space=vmem, size = 0x1000, scoped, tag = 'output window, operand 0, single buffered']
    #allocation3 [shape = 's32[1]{0}', space=sflag, size = 0x4, scoped, tag = 'scoped memory for tpu_custom_call.1']
    %7 = vsyncpa [#allocation3], 0
    // Predicated region
    $region2: #{tpu_custom_call.1} parent=1 // pred_check
      _
    $region3: #{tpu_custom_call.1} parent=1 // pred_check_branch
      %9 = sbr.rel (0) target = $region5
    $region4: #{tpu_custom_call.1} parent=1 // pred_region
      _
    $region5: #{tpu_custom_call.1} parent=1 // pred_fallthru
      _
    // Predicated region
    $region6: #{tpu_custom_call.1} parent=1 // pred_check
      _
    $region7: #{tpu_custom_call.1} parent=1 // pred_check_branch
      %11 = sbr.rel (0) target = $region9
    $region8: #{tpu_custom_call.1} parent=1 // pred_region
      _
    $region9: #{tpu_custom_call.1} parent=1 // pred_fallthru
      _
    %v12 = vld [vmem:[%s0] sm:$0xff]
    %v13 = vld [vmem:[%s1] sm:$0xf]
    %15 = vset.pattern.permute.xlu0 0
    %16 = vperm.xlu0 %15, %v12
    %v17 = vpop.permute.xlu0 %16
    %v19 = vlaneseq
    %v20 = vshrl.u32 %v19, 7
    %v21 = vsub.s32 0, %v20
    %v22 = vrot.slane %v13, %v21
    %v23 = vmul.f32 %v17, %v22
    %24 = vset.pattern.permute.xlu0 1
    %25 = vperm.xlu0 %24, %v12
    %v26 = vpop.permute.xlu0 %25
    %v28 = vlaneseq
    %v29 = vshrl.u32 %v28, 7
    %v30 = vsub.s32 1, %v29
    %v31 = vrot.slane %v13, %v30
    %v32 = vmul.f32 %v26, %v31
    %v33 = vadd.f32 %v23, %v32
    %34 = vset.pattern.permute.xlu0 2
    %35 = vperm.xlu0 %34, %v12
    %v36 = vpop.permute.xlu0 %35
    %v38 = vlaneseq
    %v39 = vshrl.u32 %v38, 7
    %v40 = vsub.s32 2, %v39
    %v41 = vrot.slane %v13, %v40
    %v42 = vmul.f32 %v36, %v41
    %v43 = vadd.f32 %v33, %v42
    %44 = vset.pattern.permute.xlu0 3
    %45 = vperm.xlu0 %44, %v12
    %v46 = vpop.permute.xlu0 %45
    %v48 = vlaneseq
    %v49 = vshrl.u32 %v48, 7
    %v50 = vsub.s32 3, %v49
    %v51 = vrot.slane %v13, %v50
    %v52 = vmul.f32 %v46, %v51
    %v53 = vadd.f32 %v43, %v52
    %54 = vst [vmem:[#allocation2] sm:$0xff] %v53
    // Predicated region
    $region10: #{tpu_custom_call.1} parent=1 // pred_check
      _
    $region11: #{tpu_custom_call.1} parent=1 // pred_check_branch
      %56 = sbr.rel (0) target = $region13
    $region12: #{tpu_custom_call.1} parent=1 // pred_region
      %s58 = ssub.s32 128, 128
      %59 = vsyncadd [#allocation3], %s58
      %s61 = sshll.u32 [#allocation2], 4
      %s62 = int_to_ptr.vmem [resolvable:$true] %s61
      %64 = dma.vmem_to_hbm [thread:$0]  %s62, 128, %s2, [#allocation3]
    $region13: #{tpu_custom_call.1} parent=1 // pred_fallthru
      _
    // Predicated region
    $region14: #{tpu_custom_call.1} parent=1 // pred_check
      _
    $region15: #{tpu_custom_call.1} parent=1 // pred_check_branch
      %66 = sbr.rel (0) target = $region17
    $region16: #{tpu_custom_call.1} parent=1 // pred_region
      %67 = dma.done [#allocation3], 128
    $region17: #{tpu_custom_call.1} parent=1 // pred_fallthru
      _
    %68 = vsyncpa [#allocation3], 1

</llo_original>
